<compile_context>
chip_gen: v7x
topology: tpu7x:2x2x1
jax: 0.10.0
libtpu: 0.0.40
codegen_flags: <defaults>
</compile_context>

<pallas_src>
import functools

import numpy as np
import jax
import jax.numpy as jnp
from jax import lax
from jax.experimental import pallas as pl
from jax.experimental.pallas import tpu as pltpu

NEG = -1e9          # padding value for CRF params (never selected by argmax)
LANE = 128


def _round_up(x, m):
    return ((x + m - 1) // m) * m


# ----------------------- Kernel 1: hidden2tag linear (tiled, bf16 MXU) -----------------------

def _linear_kernel(x_ref, w_ref, b_ref, o_ref):
    # x: (tm, H) bf16, w: (H, Kp) bf16, b: (1, Kp) f32 -> o: (tm, Kp) f32
    o_ref[...] = (
        jnp.dot(x_ref[...], w_ref[...], preferred_element_type=jnp.float32)
        + b_ref[...]
    )


def hidden2tag(x2d_bf16, w_t_bf16, b2d_f32, tm):
    R, H = x2d_bf16.shape
    Kp = w_t_bf16.shape[1]
    # VMEM budget: 2 buffers of (x tile + out tile) + resident weight/bias.
    need = 2 * (tm * H * 2 + tm * Kp * 4) + H * Kp * 2 + Kp * 4
    vmem_limit = min(48 * 1024 * 1024, max(2 * need, 16 * 1024 * 1024))
    cost = pl.CostEstimate(
        flops=2 * R * H * Kp,
        transcendentals=0,
        bytes_accessed=2 * R * H + 2 * H * Kp + 4 * R * Kp + 4 * Kp,
    )
    return pl.pallas_call(
        _linear_kernel,
        out_shape=jax.ShapeDtypeStruct((R, Kp), jnp.float32),
        grid=(R // tm,),
        in_specs=[
            pl.BlockSpec((tm, H), lambda i: (i, 0)),   # activations: tiled over rows
            pl.BlockSpec((H, Kp), lambda i: (0, 0)),   # weight: resident
            pl.BlockSpec((1, Kp), lambda i: (0, 0)),   # bias: resident
        ],
        out_specs=pl.BlockSpec((tm, Kp), lambda i: (i, 0)),
        compiler_params=pltpu.CompilerParams(
            dimension_semantics=("parallel",),
            vmem_limit_bytes=vmem_limit,
        ),
        cost_estimate=cost,
    )(x2d_bf16, w_t_bf16, b2d_f32)


# ----------------------- Kernel 2: batched CRF Viterbi decode -----------------------

def _viterbi_kernel(maxlen_ref, nwords_ref, feats_ref, trans_ref, start_ref, end_ref,
                    o_ref, bp_ref, *, num_tags):
    T, Bt, Kp = feats_ref.shape
    Tp = o_ref.shape[1]

    max_len = maxlen_ref[0]                                   # scalar int32 (SMEM)
    L_vec = nwords_ref[...]                                   # (Bt, 1) int32

    lane = lax.broadcasted_iota(jnp.int32, (Bt, Kp), 1)
    pos = lax.broadcasted_iota(jnp.int32, (Bt, Tp), 1)

    # Hoist loop-invariant loads: only the `num_tags` real transition rows matter
    # (padded tags carry -1e9 start/transition scores and can never win an argmax).
    trans_rows = [trans_ref[i:i + 1, :] for i in range(num_tags)]

    # t = 0 init: start transitions + first emissions (whole batch tile at once).
    score0 = start_ref[...] + feats_ref[0]                    # (Bt, Kp) f32

    # ---- forward max-recurrence, batched over Bt rows, bounded by max seq len ----
    def fwd_body(t, score):
        run_max = score[:, 0:1] + trans_rows[0]               # (Bt,1)+(1,Kp) broadcast
        run_arg = jnp.zeros((Bt, Kp), jnp.int32)
        for i in range(1, num_tags):                          # static unroll (K is small)
            cand = score[:, i:i + 1] + trans_rows[i]
            better = cand > run_max                           # strict > keeps first index
            run_arg = jnp.where(better, jnp.int32(i), run_arg)
            run_max = jnp.where(better, cand, run_max)
        bp_ref[t] = run_arg                                   # rows with t >= L are garbage,
        new_score = run_max + feats_ref[t]                    # but never read back (masked).
        active = t < L_vec                                    # (Bt, 1)
        return jnp.where(active, new_score, score)

    score = lax.fori_loop(1, max_len, fwd_body, score0)

    # ---- end transitions + per-row first-index argmax ----
    final = score + end_ref[...]                              # (Bt, Kp)
    maxv = jnp.max(final, axis=1, keepdims=True)
    best_last = jnp.min(jnp.where(final == maxv, lane, Kp), axis=1, keepdims=True)

    # ---- batched backtrace over absolute time (descending), single lane-dense store ----
    def bwd_body(i, carry):
        cur, out = carry
        t = max_len - 1 - i
        # Clamped bp read: when clamped (or a row is inactive) the value is discarded
        # via the masks below, so stale scratch contents are harmless (always in-bounds).
        bp_t1 = bp_ref[jnp.minimum(t + 1, T - 1)]             # (Bt, Kp) int32
        sel = jnp.sum(jnp.where(lane == cur, bp_t1, 0), axis=1, keepdims=True)
        start_mask = t == (L_vec - 1)                         # chain start for this row
        step_mask = t < (L_vec - 1)                           # follow backpointer
        new_cur = jnp.where(start_mask, best_last,
                            jnp.where(step_mask, sel, cur))
        write_mask = jnp.logical_and(pos == t, t < L_vec)
        out = jnp.where(write_mask, new_cur.astype(jnp.float32), out)
        return new_cur, out

    out0 = jnp.zeros((Bt, Tp), jnp.float32)
    _, out = lax.fori_loop(0, max_len, bwd_body, (best_last, out0))
    o_ref[...] = out                                          # one unmasked, lane-dense store


def viterbi_decode(feats_t, nwords2d, max_len, trans_p, start_p, end_p,
                   b_tile, t_out, num_tags):
    T, B_pad, Kp = feats_t.shape
    grid_spec = pltpu.PrefetchScalarGridSpec(
        num_scalar_prefetch=1,                                # max_len -> SMEM
        grid=(B_pad // b_tile,),
        in_specs=[
            pl.BlockSpec((b_tile, 1), lambda b, ml: (b, 0)),         # sequence lengths
            pl.BlockSpec((T, b_tile, Kp), lambda b, ml: (0, b, 0)),  # feats (time-major)
            pl.BlockSpec((Kp, Kp), lambda b, ml: (0, 0)),            # transitions
            pl.BlockSpec((1, Kp), lambda b, ml: (0, 0)),             # start transitions
            pl.BlockSpec((1, Kp), lambda b, ml: (0, 0)),             # end transitions
        ],
        out_specs=pl.BlockSpec((b_tile, t_out), lambda b, ml: (b, 0)),
        scratch_shapes=[pltpu.VMEM((T, b_tile, Kp), jnp.int32)],     # backpointers
    )
    return pl.pallas_call(
        functools.partial(_viterbi_kernel, num_tags=num_tags),
        out_shape=jax.ShapeDtypeStruct((B_pad, t_out), jnp.float32),
        grid_spec=grid_spec,
        # Safe to mark parallel: disjoint output blocks, scratch fully rewritten per step.
        compiler_params=pltpu.CompilerParams(dimension_semantics=("parallel",)),
    )(max_len, nwords2d, feats_t, trans_p, start_p, end_p)


# ----------------------- CRFDecoder wrapper -----------------------

class CRFDecoderPallas:
    def __init__(self, hidden_dim, num_tags, key):
        k1, k2, k3, k4, k5 = jax.random.split(key, 5)
        # nn.Linear(hidden_dim, num_tags): weight (K, H), bias (K,)
        self.W = jax.random.normal(k1, (num_tags, hidden_dim), jnp.float32) * 0.1
        self.b = jax.random.normal(k2, (num_tags,), jnp.float32) * 0.1
        # CRF(num_tags): transitions (K, K), start/end transitions (K,)
        self.trans = jax.random.normal(k3, (num_tags, num_tags), jnp.float32) * 0.1
        self.start = jax.random.normal(k4, (num_tags,), jnp.float32) * 0.1
        self.end = jax.random.normal(k5, (num_tags,), jnp.float32) * 0.1
        self.hidden_dim = hidden_dim
        self.num_tags = num_tags

        Kp = _round_up(num_tags, LANE)
        self.Kp = Kp
        # Lane-padded parameters. Pad tags get -1e9 in the CRF params so they can
        # never be selected; pad columns of the linear layer are plain zeros.
        self.W_t_p = (jnp.zeros((hidden_dim, Kp), jnp.float32)
                      .at[:, :num_tags].set(self.W.T).astype(jnp.bfloat16))
        self.b_p = jnp.zeros((1, Kp), jnp.float32).at[:, :num_tags].set(self.b)
        self.trans_p = (jnp.full((Kp, Kp), NEG, jnp.float32)
                        .at[:num_tags, :num_tags].set(self.trans))
        self.start_p = jnp.full((1, Kp), NEG, jnp.float32).at[:, :num_tags].set(self.start)
        self.end_p = jnp.full((1, Kp), NEG, jnp.float32).at[:, :num_tags].set(self.end)

    def forward(self, encoded, nwords):
        B, T, H = encoded.shape
        K, Kp = self.num_tags, self.Kp

        # batch / time / row padding (all sliced back off before returning)
        b_tile = min(128, _round_up(B, 8))
        B_pad = _round_up(B, b_tile)
        t_out = _round_up(T, LANE)

        # dropout p = 0.0 -> identity
        enc_p = jnp.pad(encoded, ((0, B_pad - B), (0, 0), (0, 0)))
        rows = B_pad * T
        tm = min(512, _round_up(rows, 16))                    # bf16 sublane multiple
        rows_pad = _round_up(rows, tm)
        x2d = jnp.pad(enc_p.reshape(rows, H), ((0, rows_pad - rows), (0, 0)))
        x2d = x2d.astype(jnp.bfloat16)

        feats_p2d = hidden2tag(x2d, self.W_t_p, self.b_p, tm)   # (rows_pad, Kp) f32
        feats_pad = feats_p2d[:rows].reshape(B_pad, T, Kp)
        feats = feats_pad[:B, :, :K]                            # ner_scores (B, T, K)

        # decode
        nwords_p = jnp.pad(nwords.astype(jnp.int32), (0, B_pad - B)).reshape(B_pad, 1)
        max_len = jnp.max(nwords_p).astype(jnp.int32).reshape(1)
        feats_t = jnp.transpose(feats_pad, (1, 0, 2))           # (T, B_pad, Kp)
        tags_full = viterbi_decode(feats_t, nwords_p, max_len,
                                   self.trans_p, self.start_p, self.end_p,
                                   b_tile, t_out, K)
        tags = tags_full[:B, :T]                                # (B, T) f32, 0-padded
        return tags, feats                                      # (ner_output, ner_scores)


# ----------------------- reference (numpy) for self-check -----------------------

def _viterbi_ref(feats, nwords, trans, start, end):
    feats = np.asarray(feats); trans = np.asarray(trans)
    start = np.asarray(start); end = np.asarray(end)
    B, T, K = feats.shape
    out = np.zeros((B, T), np.float32)
    for bi in range(B):
        L = int(nwords[bi])
        e = feats[bi]
        score = start + e[0]
        bp = np.zeros((T, K), np.int32)
        for t in range(1, L):
            cand = score[:, None] + trans
            bp[t] = np.argmax(cand, axis=0)
            score = np.max(cand, axis=0) + e[t]
        score = score + end
        best = int(np.argmax(score))
        path = [best]
        for t in range(L - 1, 0, -1):
            best = int(bp[t, best])
            path.append(best)
        path.reverse()
        out[bi, :L] = np.array(path, np.float32)
    return out


if __name__ == "__main__":
    B, T, H, K = 2, 8, 32, 5   # 5 tags, e.g. O / B-PER / I-PER / B-LOC / I-LOC
    key = jax.random.PRNGKey(0)
    k_x, k_p = jax.random.split(key)

    encoded = jax.random.normal(k_x, (B, T, H), jnp.float32)
    nwords = jnp.array([T, 5], dtype=jnp.int32)

    dec = CRFDecoderPallas(H, K, k_p)
    tags, feats = dec.forward(encoded, nwords)
    tags, feats = jax.block_until_ready((tags, feats))

    # self-check: linear projection (bf16 inputs -> loose tolerance)
    feats_ref = np.asarray(encoded).reshape(B * T, H) @ np.asarray(dec.W).T + np.asarray(dec.b)
    feats_ref = feats_ref.reshape(B, T, K)
    assert np.allclose(np.asarray(feats), feats_ref, atol=5e-2, rtol=5e-2), "feats mismatch"

    # self-check: Viterbi path (uses kernel feats -> exact match expected)
    tags_ref = _viterbi_ref(np.asarray(feats), np.asarray(nwords),
                            np.asarray(dec.trans), np.asarray(dec.start), np.asarray(dec.end))
    assert np.array_equal(np.asarray(tags), tags_ref), "viterbi tag mismatch"
    assert tags.shape == (B, T) and tags.dtype == jnp.float32
    assert feats.shape == (B, T, K)

    # TODO(synk): CRFDecoder.loss (training log-likelihood) and NERDecoder.decode
    # (ids2seq string conversion) are host-side / training paths, not implemented here.
    print("KERNEL_OK")
</pallas_src>

<mosaic_0001>
module attributes {stable_mosaic.version = 11 : i64} {
  func.func @_linear_kernel(%arg0: i32, %arg1: memref<64x32xbf16, #tpu.memory_space<vmem>>, %arg2: memref<32x128xbf16, #tpu.memory_space<vmem>>, %arg3: memref<1x128xf32, #tpu.memory_space<vmem>>, %arg4: memref<64x128xf32, #tpu.memory_space<vmem>>) attributes {dimension_semantics = [#tpu.dimension_semantics<parallel>], iteration_bounds = array<i64: 1>, scalar_prefetch = 0 : i64, scratch_operands = 0 : i64, tpu.core_type = #tpu.core_type<tc>, window_params = [{transform_indices = @transform_0, window_bounds = array<i64: 64, 32>}, {pipeline_mode = #tpu.pipeline_mode<synchronous>, transform_indices = @transform_1, window_bounds = array<i64: 32, 128>}, {pipeline_mode = #tpu.pipeline_mode<synchronous>, transform_indices = @transform_2, window_bounds = array<i64: 1, 128>}, {transform_indices = @transform_3, window_bounds = array<i64: 64, 128>}]} {
    %c0 = arith.constant 0 : index
    %c0_0 = arith.constant 0 : index
    %0 = vector.load %arg1[%c0, %c0_0] : memref<64x32xbf16, #tpu.memory_space<vmem>>, vector<64x32xbf16>
    %c0_1 = arith.constant 0 : index
    %c0_2 = arith.constant 0 : index
    %1 = vector.load %arg2[%c0_1, %c0_2] : memref<32x128xbf16, #tpu.memory_space<vmem>>, vector<32x128xbf16>
    %cst = arith.constant dense<0.000000e+00> : vector<64x128xf32>
    %2 = tpu.matmul %0, %1, %cst {dimension_numbers = #tpu.dot_dimension_numbers<[1], [0], [0], [1], [0, 0, 1, 1], [], []>} : vector<64x32xbf16>, vector<32x128xbf16>, vector<64x128xf32> -> vector<64x128xf32>
    %c0_3 = arith.constant 0 : index
    %c0_4 = arith.constant 0 : index
    %3 = vector.load %arg3[%c0_3, %c0_4] : memref<1x128xf32, #tpu.memory_space<vmem>>, vector<1x128xf32>
    %4 = vector.broadcast %3 : vector<1x128xf32> to vector<64x128xf32>
    %5 = arith.addf %2, %4 : vector<64x128xf32>
    %c0_5 = arith.constant 0 : index
    %c0_6 = arith.constant 0 : index
    %6 = vector.load %arg4[%c0_5, %c0_6] : memref<64x128xf32, #tpu.memory_space<vmem>>, vector<64x128xf32>
    tpu.vector_store %arg4[%c0_5, %c0_6], %5 {strides = array<i32>} : memref<64x128xf32, #tpu.memory_space<vmem>>, vector<64x128xf32>,
    return
  }
  func.func @transform_0(%arg0: i32) -> (i32, i32) {
    %c0_i32 = arith.constant 0 : i32
    %c0_i32_0 = arith.constant 0 : i32
    return %arg0, %c0_i32 : i32, i32
  }
  func.func @transform_1(%arg0: i32) -> (i32, i32) {
    %c0_i32 = arith.constant 0 : i32
    %c0_i32_0 = arith.constant 0 : i32
    %c0_i32_1 = arith.constant 0 : i32
    return %c0_i32, %c0_i32_0 : i32, i32
  }
  func.func @transform_2(%arg0: i32) -> (i32, i32) {
    %c0_i32 = arith.constant 0 : i32
    %c0_i32_0 = arith.constant 0 : i32
    %c0_i32_1 = arith.constant 0 : i32
    return %c0_i32, %c0_i32_0 : i32, i32
  }
  func.func @transform_3(%arg0: i32) -> (i32, i32) {
    %c0_i32 = arith.constant 0 : i32
    %c0_i32_0 = arith.constant 0 : i32
    return %arg0, %c0_i32 : i32, i32
  }
}

</mosaic_0001>

<llo_original>
// kernel: tpu_custom_call.1
$region0: #{tpu_custom_call.1}
  #allocation0 [shape = 'u32[]', space=smem, size = 0x4, offset = 0x4, fixed_abs, tag = 'smem constant byte address 0x4 - core index']
  #allocation1 [shape = 'u32[144,128]{1,0:T(1,128)}', space=vmem, size = 0x12000, scoped, tag = 'internal scratch']
  %s0 = inlined_call_operand.vmem [shape: bf16[64,32], index: 0, kind: input, shape index: {}]
  %s1 = inlined_call_operand.vmem [shape: bf16[32,128], index: 1, kind: input, shape index: {}]
  %s2 = inlined_call_operand.vmem [shape: f32[1,128], index: 2, kind: input, shape index: {}]
  %s3 = inlined_call_operand.hbm [shape: f32[64,128], index: 3, kind: output, shape index: {}]
  %s4 = sld [smem:[#allocation0]]
  $region22: #{tpu_custom_call.1} parent=0
    _
  %s6 = ssub.s32 1, %s4
  %s7 = scalar_select 0, %s6, %s4
  $region1: #{tpu_custom_call.1} parent=0
    #allocation2 [shape = 'u8[32768]{0}', space=vmem, size = 0x8000, scoped, tag = 'output window, operand 0, single buffered']
    #allocation3 [shape = 's32[1]{0}', space=sflag, size = 0x4, scoped, tag = 'scoped memory for tpu_custom_call.1']
    %8 = vsyncpa [#allocation3], 0
    // Predicated region
    $region2: #{tpu_custom_call.1} parent=1 // pred_check
      _
    $region3: #{tpu_custom_call.1} parent=1 // pred_check_branch
      %10 = sbr.rel (0) target = $region5
    $region4: #{tpu_custom_call.1} parent=1 // pred_region
      _
    $region5: #{tpu_custom_call.1} parent=1 // pred_fallthru
      _
    // Predicated region
    $region6: #{tpu_custom_call.1} parent=1 // pred_check
      _
    $region7: #{tpu_custom_call.1} parent=1 // pred_check_branch
      %12 = sbr.rel (0) target = $region9
    $region8: #{tpu_custom_call.1} parent=1 // pred_region
      _
    $region9: #{tpu_custom_call.1} parent=1 // pred_fallthru
      _
    // Predicated region
    $region10: #{tpu_custom_call.1} parent=1 // pred_check
      _
    $region11: #{tpu_custom_call.1} parent=1 // pred_check_branch
      %14 = sbr.rel (0) target = $region13
    $region12: #{tpu_custom_call.1} parent=1 // pred_region
      _
    $region13: #{tpu_custom_call.1} parent=1 // pred_fallthru
      _
    %v16 = vld [vmem:[%s0] sm:$0xf]
    %v17 = vld [vmem:[%s0 + $0x4] sm:$0xf]
    %v18 = vld [vmem:[%s0 + $0x8] sm:$0xf]
    %v19 = vld [vmem:[%s0 + $0xc] sm:$0xf]
    %v20 = vld [vmem:[%s0 + $0x10] sm:$0xf]
    %v21 = vld [vmem:[%s0 + $0x14] sm:$0xf]
    %v22 = vld [vmem:[%s0 + $0x18] sm:$0xf]
    %v23 = vld [vmem:[%s0 + $0x1c] sm:$0xf]
    %v24 = vld [vmem:[%s1] sm:$0xf]
    %v25 = vld [vmem:[%s1 + $0x4] sm:$0xf]
    %v26 = vld [vmem:[%s1 + $0x8] sm:$0xf]
    %v27 = vld [vmem:[%s1 + $0xc] sm:$0xf]
    %v28 = vld [vmem:[%s2] sm:$0x1]
    %v30 = vlaneseq
    %v31 = vshrl.u32 %v30, 7
    %v32 = vsub.s32 0, %v31
    %v33 = vrot.slane %v28, %v32
    %v43 = vunpack.c.l.b16 %v16
    %v44 = vunpack.c.l.b16 %v17
    %v45 = vunpack.c.l.b16 %v18
    %v46 = vunpack.c.l.b16 %v19
    %v47 = vunpack.c.l.b16 %v20
    %v48 = vunpack.c.l.b16 %v21
    %v49 = vunpack.c.l.b16 %v22
    %v50 = vunpack.c.l.b16 %v23
    %v51 = vpack.c.b16 %v44, %v43
    %v52 = vpack.c.b16 %v46, %v45
    %v53 = vpack.c.b16 %v48, %v47
    %v54 = vpack.c.b16 %v50, %v49
    %v59 = vunpack.c.l.b16 %v24
    %v60 = vunpack.c.l.b16 %v25
    %v61 = vunpack.c.l.b16 %v26
    %v62 = vunpack.c.l.b16 %v27
    %v63 = vpack.c.b16 %v60, %v59
    %v64 = vpack.c.b16 %v62, %v61
    %vm67 = vcmask 261120
    %v69 = vsel %vm67, %v51, 0
    %v72 = vsel %vm67, %v52, 0
    %v75 = vsel %vm67, %v53, 0
    %v78 = vsel %vm67, %v54, 0
    %80 = vmatprep.subr.bf16.mxu0 0
    %81 = vmatpush1.bf16.msra.mxu0 %v63
    %82 = vmatprep.subr.bf16.mxu0 0
    %83 = vmatpush1.bf16.msra.mxu0 %v64
    %84 = vmatprep.subr.bf16.mxu0 0
    %85 = vmatpush1.bf16.msra.mxu0 0
    %86 = vmatprep.subr.bf16.mxu0 0
    %87 = vmatpush1.bf16.msra.mxu0 0
    %88 = vmatprep.subr.bf16.mxu0 0
    %89 = vmatpush1.bf16.msra.mxu0 0
    %90 = vmatprep.subr.bf16.mxu0 0
    %91 = vmatpush1.bf16.msra.mxu0 0
    %92 = vmatprep.subr.bf16.mxu0 0
    %93 = vmatpush1.bf16.msra.mxu0 0
    %94 = vmatprep.subr.bf16.mxu0 0
    %95 = vmatpush1.bf16.msra.mxu0 0
    %96 = vmatprep.subr.bf16.mxu0 0
    %97 = vmatpush1.bf16.msra.mxu0 0
    %98 = vmatprep.subr.bf16.mxu0 0
    %99 = vmatpush1.bf16.msra.mxu0 0
    %100 = vmatprep.subr.bf16.mxu0 0
    %101 = vmatpush1.bf16.msra.mxu0 0
    %102 = vmatprep.subr.bf16.mxu0 0
    %103 = vmatpush1.bf16.msra.mxu0 0
    %104 = vmatprep.subr.bf16.mxu0 0
    %105 = vmatpush1.bf16.msra.mxu0 0
    %106 = vmatprep.subr.bf16.mxu0 0
    %107 = vmatpush1.bf16.msra.mxu0 0
    %108 = vmatprep.subr.bf16.mxu0 0
    %109 = vmatpush1.bf16.msra.mxu0 0
    %110 = vmatprep.subr.bf16.mxu0 0
    %111 = vmatpush1.bf16.msra.mxu0 0
    %112 = vmatprep.mubr.bf16.mxu0 0
    %113 = vmatmul.mubr.bf16.gmra.mrb[0].mxu0 %v69
    %v114 = vpop.f32.mrb[0].mxu0
    %v115 = vadd.f32 %v33, %v114
    %v116 = vpop.f32.mrb[0].mxu0
    %v117 = vpop.f32.mrb[0].mxu0
    %v118 = vadd.f32 %v33, %v117
    %v119 = vpop.f32.mrb[0].mxu0
    %120 = vmatprep.mubr.bf16.mxu0 0
    %121 = vmatmul.mubr.bf16.gmra.mrb[0].mxu0 %v72
    %v122 = vpop.f32.mrb[0].mxu0
    %v123 = vadd.f32 %v33, %v122
    %v124 = vpop.f32.mrb[0].mxu0
    %v125 = vpop.f32.mrb[0].mxu0
    %v126 = vadd.f32 %v33, %v125
    %v127 = vpop.f32.mrb[0].mxu0
    %128 = vmatprep.mubr.bf16.mxu0 0
    %129 = vmatmul.mubr.bf16.gmra.mrb[0].mxu0 %v75
    %v130 = vpop.f32.mrb[0].mxu0
    %v131 = vadd.f32 %v33, %v130
    %v132 = vpop.f32.mrb[0].mxu0
    %v133 = vpop.f32.mrb[0].mxu0
    %v134 = vadd.f32 %v33, %v133
    %v135 = vpop.f32.mrb[0].mxu0
    %136 = vmatprep.mubr.bf16.mxu0 0
    %137 = vmatmul.mubr.bf16.gmra.mrb[0].mxu0 %v78
    %v138 = vpop.f32.mrb[0].mxu0
    %v139 = vadd.f32 %v33, %v138
    %v140 = vpop.f32.mrb[0].mxu0
    %v141 = vpop.f32.mrb[0].mxu0
    %v142 = vadd.f32 %v33, %v141
    %v143 = vpop.f32.mrb[0].mxu0
    %144 = vdwg.mxu0
    %145 = vst [vmem:[#allocation2] sm:$0xff] %v115
    %146 = vst [vmem:[#allocation2 + $0x8] sm:$0xff] %v118
    %147 = vst [vmem:[#allocation2 + $0x10] sm:$0xff] %v123
    %148 = vst [vmem:[#allocation2 + $0x18] sm:$0xff] %v126
    %149 = vst [vmem:[#allocation2 + $0x20] sm:$0xff] %v131
    %150 = vst [vmem:[#allocation2 + $0x28] sm:$0xff] %v134
    %151 = vst [vmem:[#allocation2 + $0x30] sm:$0xff] %v139
    %152 = vst [vmem:[#allocation2 + $0x38] sm:$0xff] %v142
    // Predicated region
    $region14: #{tpu_custom_call.1} parent=1 // pred_check
      _
    $region15: #{tpu_custom_call.1} parent=1 // pred_check_branch
      %154 = sbr.rel (0) target = $region17
    $region16: #{tpu_custom_call.1} parent=1 // pred_region
      %s156 = ssub.s32 1024, 1024
      %157 = vsyncadd [#allocation3], %s156
      %s158 = sshll.u32 [#allocation2], 4
      %s159 = int_to_ptr.vmem [resolvable:$true] %s158
      %164 = dma.vmem_to_hbm [thread:$0]  %s159, 1024, %s3, [#allocation3], 128, 128, 8
    $region17: #{tpu_custom_call.1} parent=1 // pred_fallthru
      _
    // Predicated region
    $region18: #{tpu_custom_call.1} parent=1 // pred_check
      _
    $region19: #{tpu_custom_call.1} parent=1 // pred_check_branch
      %166 = sbr.rel (0) target = $region21
    $region20: #{tpu_custom_call.1} parent=1 // pred_region
      %167 = dma.done [#allocation3], 1024
    $region21: #{tpu_custom_call.1} parent=1 // pred_fallthru
      _
    %168 = vsyncpa [#allocation3], 1

</llo_original>
